<compile_context>
chip_gen: v6e
topology: v6e:2x2x1
jax: 0.10.0
libtpu: 0.0.40
codegen_flags: <defaults>
</compile_context>

<pallas_src>
import jax
import jax.numpy as jnp
from jax.experimental import pallas as pl
from jax.experimental.pallas import tpu as pltpu


def _mlp_kernel(r_ref, add_ref, w1a_ref, w2_ref, b2_ref, o_ref):
    # h = ReLU(report @ W1[:768] + (sector_emb @ W1[768:] + b1))
    r = r_ref[...].astype(w1a_ref.dtype)          # f32 -> bf16 (VPU), MXU bf16 path
    h = jnp.dot(r, w1a_ref[...], preferred_element_type=jnp.float32)   # (TB, 256)
    h = jnp.maximum(h + add_ref[...], 0.0)                              # ReLU, f32
    # Second Linear (256 -> 1) as VPU mul + lane reduction (no N=1 MXU pass).
    o = jnp.sum(h * w2_ref[...], axis=-1, keepdims=True) + b2_ref[0]    # (TB, 1)
    o_ref[...] = o.astype(o_ref.dtype)


def prepare_params(params, weight_dtype=jnp.bfloat16):
    """One-time (per weight load) preparation: split/fold/cast the weights."""
    w1 = params["w1"]                                           # (800, 256)
    w1a = w1[:768, :].astype(weight_dtype)                      # (768, 256) bf16
    # Fold the sector branch + b1:  per-sector add term (num_sectors, 256).
    sector_proj_b1 = (
        params["sector_embedding"].astype(jnp.float32) @ w1[768:, :].astype(jnp.float32)
        + params["b1"].astype(jnp.float32)
    )
    w2_row = params["w2"].reshape(1, -1).astype(jnp.float32)    # (1, 256)
    b2 = params["b2"].reshape(-1).astype(jnp.float32)           # (1,)
    return {"w1a": w1a, "sector_proj_b1": sector_proj_b1,
            "w2_row": w2_row, "b2": b2}


def _round_up(x, m):
    return ((x + m - 1) // m) * m


def finbert_regressor_forward(report_emb, sector_id, prepared, *, block_b=128):
    """report_emb: (B, 768) f32, sector_id: (B,) int32 -> (B,) f32."""
    B = report_emb.shape[0]
    w1a = prepared["w1a"]                                        # (768, 256)
    w2_row = prepared["w2_row"]                                  # (1, 256)
    b2 = prepared["b2"]                                          # (1,)

    # Glue: cheap gather of the precomputed (sector @ W1b + b1) rows.
    add_term = jnp.take(prepared["sector_proj_b1"], sector_id, axis=0)  # (B, 256)

    # Batch tile: multiple of 8 (f32 sublanes); 128 fills the MXU M dim.
    TB = max(8, min(block_b, _round_up(B, 8)))
    B_pad = _round_up(B, TB)
    if B_pad != B:
        pad = B_pad - B
        report_emb = jnp.pad(report_emb, ((0, pad), (0, 0)))
        add_term = jnp.pad(add_term, ((0, pad), (0, 0)))
    grid = (B_pad // TB,)

    flops = 2 * B_pad * 768 * 256 + 3 * B_pad * 256
    bytes_accessed = (
        B_pad * 768 * report_emb.dtype.itemsize     # report stream
        + B_pad * 256 * 4                           # add term stream
        + w1a.size * w1a.dtype.itemsize             # resident weights (fetched once)
        + 256 * 4 + 4                               # w2 row + b2
        + B_pad * 4                                 # output
    )

    out = pl.pallas_call(
        _mlp_kernel,
        out_shape=jax.ShapeDtypeStruct((B_pad, 1), jnp.float32),
        grid=grid,
        in_specs=[
            pl.BlockSpec((TB, 768), lambda i: (i, 0)),          # report tile (streamed)
            pl.BlockSpec((TB, 256), lambda i: (i, 0)),          # sector+b1 add term
            pl.BlockSpec((768, 256), lambda i: (0, 0)),         # W1a, VMEM-resident
            pl.BlockSpec((1, 256), lambda i: (0, 0)),           # w2 row, VMEM-resident
            pl.BlockSpec(memory_space=pltpu.MemorySpace.SMEM),  # b2 scalar in SMEM
        ],
        out_specs=pl.BlockSpec((TB, 1), lambda i: (i, 0)),
        compiler_params=pltpu.CompilerParams(
            dimension_semantics=("parallel",)),                 # 2-TC shard on v7x
        cost_estimate=pl.CostEstimate(
            flops=flops, transcendentals=0, bytes_accessed=bytes_accessed),
    )(report_emb, add_term, w1a, w2_row, b2)

    return out[:B, 0]                                            # squeeze(-1)


def init_params(key, num_sectors, sector_embed_dim=32):
    """Deterministic init mirroring the PyTorch module's parameter shapes."""
    k_emb, k_w1, k_b1, k_w2, k_b2 = jax.random.split(key, 5)
    d_in1 = 768 + sector_embed_dim
    lim1 = 1.0 / jnp.sqrt(d_in1)
    lim2 = 1.0 / jnp.sqrt(256.0)
    return {
        "sector_embedding": jax.random.normal(
            k_emb, (num_sectors, sector_embed_dim), jnp.float32),
        "w1": jax.random.uniform(k_w1, (d_in1, 256), jnp.float32, -lim1, lim1),
        "b1": jax.random.uniform(k_b1, (256,), jnp.float32, -lim1, lim1),
        "w2": jax.random.uniform(k_w2, (256, 1), jnp.float32, -lim2, lim2),
        "b2": jax.random.uniform(k_b2, (1,), jnp.float32, -lim2, lim2),
    }


def _reference_forward(report_emb, sector_id, params):
    """Pure-f32 reference matching the PyTorch module exactly."""
    sector_emb = jnp.take(params["sector_embedding"], sector_id, axis=0)
    x = jnp.concatenate([report_emb, sector_emb], axis=1)
    h = jnp.maximum(x @ params["w1"] + params["b1"], 0.0)
    return (h @ params["w2"] + params["b2"])[:, 0]


def _reference_forward_prepared(report_emb, sector_id, prepared):
    """Reference using the same bf16-quantized W1a path as the kernel."""
    r = report_emb.astype(prepared["w1a"].dtype).astype(jnp.float32)
    w1a = prepared["w1a"].astype(jnp.float32)
    add = jnp.take(prepared["sector_proj_b1"], sector_id, axis=0)
    h = jnp.maximum(r @ w1a + add, 0.0)
    return jnp.sum(h * prepared["w2_row"], axis=-1) + prepared["b2"][0]


if __name__ == "__main__":
    key = jax.random.PRNGKey(0)
    k_params, k_rep, k_sec = jax.random.split(key, 3)

    num_sectors = 11
    B = 8  # small batch

    params = init_params(k_params, num_sectors, sector_embed_dim=32)
    prepared = prepare_params(params, weight_dtype=jnp.bfloat16)

    report_emb = jax.random.normal(k_rep, (B, 768), jnp.float32)
    sector_id = jax.random.randint(k_sec, (B,), 0, num_sectors, jnp.int32)

    out = finbert_regressor_forward(report_emb, sector_id, prepared)
    out = jax.block_until_ready(out)
    assert out.shape == (B,)

    # Strict check vs. a reference that uses the same bf16-quantized weights.
    ref_q = _reference_forward_prepared(report_emb, sector_id, prepared)
    assert jnp.allclose(out, ref_q, atol=1e-2, rtol=1e-2), (out, ref_q)

    # Loose check vs. the pure-f32 module semantics (bf16 weight storage only
    # introduces ~1e-3-scale deviation).
    ref = _reference_forward(report_emb, sector_id, params)
    assert jnp.allclose(out, ref, atol=5e-2, rtol=5e-2), (out, ref)

    print("KERNEL_OK")
</pallas_src>

<mosaic_0001>
module attributes {stable_mosaic.version = 11 : i64} {
  func.func @_mlp_kernel(%arg0: i32, %arg1: memref<8x768xf32, #tpu.memory_space<vmem>>, %arg2: memref<8x256xf32, #tpu.memory_space<vmem>>, %arg3: memref<768x256xbf16, #tpu.memory_space<vmem>>, %arg4: memref<1x256xf32, #tpu.memory_space<vmem>>, %arg5: memref<1xf32, #tpu.memory_space<smem>>, %arg6: memref<8x1xf32, #tpu.memory_space<vmem>>) attributes {dimension_semantics = [#tpu.dimension_semantics<parallel>], iteration_bounds = array<i64: 1>, scalar_prefetch = 0 : i64, scratch_operands = 0 : i64, tpu.core_type = #tpu.core_type<tc>, window_params = [{transform_indices = @transform_0, window_bounds = array<i64: 8, 768>}, {transform_indices = @transform_1, window_bounds = array<i64: 8, 256>}, {pipeline_mode = #tpu.pipeline_mode<synchronous>, transform_indices = @transform_2, window_bounds = array<i64: 768, 256>}, {pipeline_mode = #tpu.pipeline_mode<synchronous>, transform_indices = @transform_3, window_bounds = array<i64: 1, 256>}, {transform_indices = @transform_4, window_bounds = array<i64: 1>}, {transform_indices = @transform_5, window_bounds = array<i64: 8, 1>}]} {
    %c0 = arith.constant 0 : index
    %c0_0 = arith.constant 0 : index
    %0 = vector.load %arg1[%c0, %c0_0] : memref<8x768xf32, #tpu.memory_space<vmem>>, vector<8x768xf32>
    %1 = arith.truncf %0 : vector<8x768xf32> to vector<8x768xbf16>
    %c0_1 = arith.constant 0 : index
    %c0_2 = arith.constant 0 : index
    %2 = vector.load %arg3[%c0_1, %c0_2] : memref<768x256xbf16, #tpu.memory_space<vmem>>, vector<768x256xbf16>
    %cst = arith.constant dense<0.000000e+00> : vector<8x256xf32>
    %3 = tpu.matmul %1, %2, %cst {dimension_numbers = #tpu.dot_dimension_numbers<[1], [0], [0], [1], [0, 0, 1, 1], [], []>} : vector<8x768xbf16>, vector<768x256xbf16>, vector<8x256xf32> -> vector<8x256xf32>
    %c0_3 = arith.constant 0 : index
    %c0_4 = arith.constant 0 : index
    %4 = vector.load %arg2[%c0_3, %c0_4] : memref<8x256xf32, #tpu.memory_space<vmem>>, vector<8x256xf32>
    %5 = arith.addf %3, %4 : vector<8x256xf32>
    %cst_5 = arith.constant 0.000000e+00 : f32
    %6 = vector.broadcast %cst_5 : f32 to vector<8x256xf32>
    %7 = arith.maximumf %5, %6 : vector<8x256xf32>
    %c0_6 = arith.constant 0 : index
    %c0_7 = arith.constant 0 : index
    %8 = vector.load %arg4[%c0_6, %c0_7] : memref<1x256xf32, #tpu.memory_space<vmem>>, vector<1x256xf32>
    %9 = vector.broadcast %8 : vector<1x256xf32> to vector<8x256xf32>
    %10 = arith.mulf %7, %9 : vector<8x256xf32>
    %cst_8 = arith.constant dense<0.000000e+00> : vector<8xf32>
    %11 = vector.multi_reduction <add>, %10, %cst_8 [1] : vector<8x256xf32> to vector<8xf32>
    %12 = vector.shape_cast %11 : vector<8xf32> to vector<8x1xf32>
    %c0_9 = arith.constant 0 : index
    %13 = memref.load %arg5[%c0_9] : memref<1xf32, #tpu.memory_space<smem>>
    %14 = vector.broadcast %13 : f32 to vector<8x1xf32>
    %15 = arith.addf %12, %14 : vector<8x1xf32>
    %c0_10 = arith.constant 0 : index
    %c0_11 = arith.constant 0 : index
    %16 = vector.load %arg6[%c0_10, %c0_11] : memref<8x1xf32, #tpu.memory_space<vmem>>, vector<8x1xf32>
    tpu.vector_store %arg6[%c0_10, %c0_11], %15 {strides = array<i32>} : memref<8x1xf32, #tpu.memory_space<vmem>>, vector<8x1xf32>,
    return
  }
  func.func @transform_0(%arg0: i32) -> (i32, i32) {
    %c0_i32 = arith.constant 0 : i32
    %c0_i32_0 = arith.constant 0 : i32
    return %arg0, %c0_i32 : i32, i32
  }
  func.func @transform_1(%arg0: i32) -> (i32, i32) {
    %c0_i32 = arith.constant 0 : i32
    %c0_i32_0 = arith.constant 0 : i32
    return %arg0, %c0_i32 : i32, i32
  }
  func.func @transform_2(%arg0: i32) -> (i32, i32) {
    %c0_i32 = arith.constant 0 : i32
    %c0_i32_0 = arith.constant 0 : i32
    %c0_i32_1 = arith.constant 0 : i32
    return %c0_i32, %c0_i32_0 : i32, i32
  }
  func.func @transform_3(%arg0: i32) -> (i32, i32) {
    %c0_i32 = arith.constant 0 : i32
    %c0_i32_0 = arith.constant 0 : i32
    %c0_i32_1 = arith.constant 0 : i32
    return %c0_i32, %c0_i32_0 : i32, i32
  }
  func.func @transform_4(%arg0: i32) -> i32 {
    %c0_i32 = arith.constant 0 : i32
    %c0_i32_0 = arith.constant 0 : i32
    return %c0_i32 : i32
  }
  func.func @transform_5(%arg0: i32) -> (i32, i32) {
    %c0_i32 = arith.constant 0 : i32
    %c0_i32_0 = arith.constant 0 : i32
    return %arg0, %c0_i32 : i32, i32
  }
}

</mosaic_0001>

<llo_original>
// kernel: tpu_custom_call.1
$region0: #{tpu_custom_call.1}
  #allocation0 [shape = 'u32[]', space=smem, size = 0x4, offset = 0x4, fixed_abs, tag = 'smem constant byte address 0x4 - core index']
  #allocation1 [shape = 'u32[144,128]{1,0:T(1,128)}', space=vmem, size = 0x12000, scoped, tag = 'internal scratch']
  #allocation2 [shape = 'f32[1]{0:T(128)S(6)}', space=smem, size = 0x200, scoped, tag = 'scoped memory for tpu_custom_call.1']
  %s0 = inlined_call_operand.hbm [shape: f32[8,768], index: 0, kind: input, shape index: {}]
  %s1 = inlined_call_operand.hbm [shape: f32[8,256], index: 1, kind: input, shape index: {}]
  %s2 = inlined_call_operand.hbm [shape: bf16[768,256], index: 2, kind: input, shape index: {}]
  %s3 = inlined_call_operand.vmem [shape: f32[1,256], index: 3, kind: input, shape index: {}]
  %s4 = inlined_call_operand.<no memory space> [shape: f32[1], index: 4, kind: input, shape index: {}]
  %s5 = inlined_call_operand.vmem [shape: f32[8,1], index: 5, kind: output, shape index: {}]
  %s6 = sld [smem:[#allocation0]]
  $region42: #{tpu_custom_call.1} parent=0
    _
  %s8 = ssub.s32 1, %s6
  %s9 = scalar_select 0, %s8, %s6
  %10 = sst [smem:[#allocation2]] %s4
  $region1: #{tpu_custom_call.1} parent=0
    #allocation3 [shape = 'u8[24576]{0}', space=vmem, size = 0x6000, scoped, tag = 'input window, operand 0, single buffered']
    #allocation4 [shape = 's32[1]{0}', space=sflag, size = 0x4, scoped, tag = 'scoped memory for tpu_custom_call.1']
    #allocation5 [shape = 'u8[8192]{0}', space=vmem, size = 0x2000, scoped, tag = 'input window, operand 1, single buffered']
    #allocation6 [shape = 's32[1]{0}', space=sflag, size = 0x4, scoped, tag = 'scoped memory for tpu_custom_call.1']
    #allocation7 [shape = 'u8[393216]{0}', space=vmem, size = 0x60000, scoped, tag = 'input window, operand 2, single buffered']
    %11 = vsyncpa [#allocation4], 0
    %12 = vsyncpa [#allocation6], 0
    // Predicated region
    $region2: #{tpu_custom_call.1} parent=1 // pred_check
      _
    $region3: #{tpu_custom_call.1} parent=1 // pred_check_branch
      %14 = sbr.rel (0) target = $region5
    $region4: #{tpu_custom_call.1} parent=1 // pred_region
      %s16 = ssub.s32 768, 768
      %17 = vsyncadd [#allocation4], %s16
      %s19 = sshll.u32 [#allocation3], 4
      %s20 = int_to_ptr.vmem [resolvable:$true] %s19
      %22 = dma.hbm_to_vmem [thread:$0]  %s0, 768, %s20, [#allocation4]
    $region5: #{tpu_custom_call.1} parent=1 // pred_fallthru
      _
    // Predicated region
    $region6: #{tpu_custom_call.1} parent=1 // pred_check
      _
    $region7: #{tpu_custom_call.1} parent=1 // pred_check_branch
      %24 = sbr.rel (0) target = $region9
    $region8: #{tpu_custom_call.1} parent=1 // pred_region
      %s26 = ssub.s32 256, 256
      %27 = vsyncadd [#allocation6], %s26
      %s29 = sshll.u32 [#allocation5], 4
      %s30 = int_to_ptr.vmem [resolvable:$true] %s29
      %32 = dma.hbm_to_vmem [thread:$0]  %s1, 256, %s30, [#allocation6]
    $region9: #{tpu_custom_call.1} parent=1 // pred_fallthru
      _
    // Predicated region
    $region10: #{tpu_custom_call.1} parent=1 // pred_check
      _
    $region11: #{tpu_custom_call.1} parent=1 // pred_check_branch
      %34 = sbr.rel (0) target = $region13
    $region12: #{tpu_custom_call.1} parent=1 // pred_region
      %s36 = ssub.s32 12288, 12288
      %37 = vsyncadd [#allocation6], %s36
      %s38 = sshll.u32 [#allocation7], 4
      %s39 = int_to_ptr.vmem [resolvable:$true] %s38
      %44 = dma.hbm_to_vmem [thread:$0]  %s2, 12288, %s39, [#allocation6], 128, 128, 8
    $region13: #{tpu_custom_call.1} parent=1 // pred_fallthru
      _
    // Predicated region
    $region14: #{tpu_custom_call.1} parent=1 // pred_check
      _
    $region15: #{tpu_custom_call.1} parent=1 // pred_check_branch
      %46 = sbr.rel (0) target = $region17
    $region16: #{tpu_custom_call.1} parent=1 // pred_region
      _
    $region17: #{tpu_custom_call.1} parent=1 // pred_fallthru
      _
    // Predicated region
    $region18: #{tpu_custom_call.1} parent=1 // pred_check
      _
    $region19: #{tpu_custom_call.1} parent=1 // pred_check_branch
      %48 = sbr.rel (0) target = $region21
    $region20: #{tpu_custom_call.1} parent=1 // pred_region
      _
    $region21: #{tpu_custom_call.1} parent=1 // pred_fallthru
      _
    // Predicated region
    $region22: #{tpu_custom_call.1} parent=1 // pred_check
      _
    $region23: #{tpu_custom_call.1} parent=1 // pred_check_branch
      %50 = sbr.rel (0) target = $region25
    $region24: #{tpu_custom_call.1} parent=1 // pred_region
      %51 = dma.done [#allocation4], 768
    $region25: #{tpu_custom_call.1} parent=1 // pred_fallthru
      _
    // Predicated region
    $region26: #{tpu_custom_call.1} parent=1 // pred_check
      _
    $region27: #{tpu_custom_call.1} parent=1 // pred_check_branch
      %53 = sbr.rel (0) target = $region29
    $region28: #{tpu_custom_call.1} parent=1 // pred_region
      %54 = dma.done [#allocation6], 256
    $region29: #{tpu_custom_call.1} parent=1 // pred_fallthru
      _
    // Predicated region
    $region30: #{tpu_custom_call.1} parent=1 // pred_check
      _
    $region31: #{tpu_custom_call.1} parent=1 // pred_check_branch
      %56 = sbr.rel (0) target = $region33
    $region32: #{tpu_custom_call.1} parent=1 // pred_region
      %57 = dma.done [#allocation6], 12288
    $region33: #{tpu_custom_call.1} parent=1 // pred_fallthru
      _
    %v58 = vld [vmem:[#allocation3] sm:$0xff]
    %v59 = vld [vmem:[#allocation3 + $0x8] sm:$0xff]
    %v60 = vld [vmem:[#allocation3 + $0x10] sm:$0xff]
    %v61 = vld [vmem:[#allocation3 + $0x18] sm:$0xff]
    %v62 = vld [vmem:[#allocation3 + $0x20] sm:$0xff]
    %v63 = vld [vmem:[#allocation3 + $0x28] sm:$0xff]
    %v64 = vpack.c.bf16 %v58, %v58
    %v65 = vpack.c.bf16 %v59, %v59
    %v66 = vpack.c.bf16 %v60, %v60
    %v67 = vpack.c.bf16 %v61, %v61
    %v68 = vpack.c.bf16 %v62, %v62
    %v69 = vpack.c.bf16 %v63, %v63
    %v70 = vld [vmem:[#allocation7] sm:$0xff]
    %v71 = vld [vmem:[#allocation7 + $0x8] sm:$0xff]
    %v72 = vld [vmem:[#allocation7 + $0x10] sm:$0xff]
    %v73 = vld [vmem:[#allocation7 + $0x18] sm:$0xff]
    %v74 = vld [vmem:[#allocation7 + $0x20] sm:$0xff]
    %v75 = vld [vmem:[#allocation7 + $0x28] sm:$0xff]
    %v76 = vld [vmem:[#allocation7 + $0x30] sm:$0xff]
    %v77 = vld [vmem:[#allocation7 + $0x38] sm:$0xff]
    %v78 = vld [vmem:[#allocation7 + $0x40] sm:$0xff]
    %v79 = vld [vmem:[#allocation7 + $0x48] sm:$0xff]
    %v80 = vld [vmem:[#allocation7 + $0x50] sm:$0xff]
    %v81 = vld [vmem:[#allocation7 + $0x58] sm:$0xff]
    %v82 = vld [vmem:[#allocation7 + $0x60] sm:$0xff]
    %v83 = vld [vmem:[#allocation7 + $0x68] sm:$0xff]
    %v84 = vld [vmem:[#allocation7 + $0x70] sm:$0xff]
    %v85 = vld [vmem:[#allocation7 + $0x78] sm:$0xff]
    %v86 = vld [vmem:[#allocation7 + $0x80] sm:$0xff]
    %v87 = vld [vmem:[#allocation7 + $0x88] sm:$0xff]
    %v88 = vld [vmem:[#allocation7 + $0x90] sm:$0xff]
    %v89 = vld [vmem:[#allocation7 + $0x98] sm:$0xff]
    %v90 = vld [vmem:[#allocation7 + $0xa0] sm:$0xff]
    %v91 = vld [vmem:[#allocation7 + $0xa8] sm:$0xff]
    %v92 = vld [vmem:[#allocation7 + $0xb0] sm:$0xff]
    %v93 = vld [vmem:[#allocation7 + $0xb8] sm:$0xff]
    %v94 = vld [vmem:[#allocation7 + $0xc0] sm:$0xff]
    %v95 = vld [vmem:[#allocation7 + $0xc8] sm:$0xff]
    %v96 = vld [vmem:[#allocation7 + $0xd0] sm:$0xff]
    %v97 = vld [vmem:[#allocation7 + $0xd8] sm:$0xff]
    %v98 = vld [vmem:[#allocation7 + $0xe0] sm:$0xff]
    %v99 = vld [vmem:[#allocation7 + $0xe8] sm:$0xff]
    %v100 = vld [vmem:[#allocation7 + $0xf0] sm:$0xff]
    %v101 = vld [vmem:[#allocation7 + $0xf8] sm:$0xff]
    %v102 = vld [vmem:[#allocation7 + $0x100] sm:$0xff]
    %v103 = vld [vmem:[#allocation7 + $0x108] sm:$0xff]
    %v104 = vld [vmem:[#allocation7 + $0x110] sm:$0xff]
    %v105 = vld [vmem:[#allocation7 + $0x118] sm:$0xff]
    %v106 = vld [vmem:[#allocation7 + $0x120] sm:$0xff]
    %v107 = vld [vmem:[#allocation7 + $0x128] sm:$0xff]
    %v108 = vld [vmem:[#allocation7 + $0x130] sm:$0xff]
    %v109 = vld [vmem:[#allocation7 + $0x138] sm:$0xff]
    %v110 = vld [vmem:[#allocation7 + $0x140] sm:$0xff]
    %v111 = vld [vmem:[#allocation7 + $0x148] sm:$0xff]
    %v112 = vld [vmem:[#allocation7 + $0x150] sm:$0xff]
    %v113 = vld [vmem:[#allocation7 + $0x158] sm:$0xff]
    %v114 = vld [vmem:[#allocation7 + $0x160] sm:$0xff]
    %v115 = vld [vmem:[#allocation7 + $0x168] sm:$0xff]
    %v116 = vld [vmem:[#allocation7 + $0x170] sm:$0xff]
    %v117 = vld [vmem:[#allocation7 + $0x178] sm:$0xff]
    %v118 = vld [vmem:[#allocation7 + $0x180] sm:$0xff]
    %v119 = vld [vmem:[#allocation7 + $0x188] sm:$0xff]
    %v120 = vld [vmem:[#allocation7 + $0x190] sm:$0xff]
    %v121 = vld [vmem:[#allocation7 + $0x198] sm:$0xff]
    %v122 = vld [vmem:[#allocation7 + $0x1a0] sm:$0xff]
    %v123 = vld [vmem:[#allocation7 + $0x1a8] sm:$0xff]
    %v124 = vld [vmem:[#allocation7 + $0x1b0] sm:$0xff]
    %v125 = vld [vmem:[#allocation7 + $0x1b8] sm:$0xff]
    %v126 = vld [vmem:[#allocation7 + $0x1c0] sm:$0xff]
    %v127 = vld [vmem:[#allocation7 + $0x1c8] sm:$0xff]
    %v128 = vld [vmem:[#allocation7 + $0x1d0] sm:$0xff]
    %v129 = vld [vmem:[#allocation7 + $0x1d8] sm:$0xff]
    %v130 = vld [vmem:[#allocation7 + $0x1e0] sm:$0xff]
    %v131 = vld [vmem:[#allocation7 + $0x1e8] sm:$0xff]
    %v132 = vld [vmem:[#allocation7 + $0x1f0] sm:$0xff]
    %v133 = vld [vmem:[#allocation7 + $0x1f8] sm:$0xff]
    %v134 = vld [vmem:[#allocation7 + $0x200] sm:$0xff]
    %v135 = vld [vmem:[#allocation7 + $0x208] sm:$0xff]
    %v136 = vld [vmem:[#allocation7 + $0x210] sm:$0xff]
    %v137 = vld [vmem:[#allocation7 + $0x218] sm:$0xff]
    %v138 = vld [vmem:[#allocation7 + $0x220] sm:$0xff]
    %v139 = vld [vmem:[#allocation7 + $0x228] sm:$0xff]
    %v140 = vld [vmem:[#allocation7 + $0x230] sm:$0xff]
    %v141 = vld [vmem:[#allocation7 + $0x238] sm:$0xff]
    %v142 = vld [vmem:[#allocation7 + $0x240] sm:$0xff]
    %v143 = vld [vmem:[#allocation7 + $0x248] sm:$0xff]
    %v144 = vld [vmem:[#allocation7 + $0x250] sm:$0xff]
    %v145 = vld [vmem:[#allocation7 + $0x258] sm:$0xff]
    %v146 = vld [vmem:[#allocation7 + $0x260] sm:$0xff]
    %v147 = vld [vmem:[#allocation7 + $0x268] sm:$0xff]
    %v148 = vld [vmem:[#allocation7 + $0x270] sm:$0xff]
    %v149 = vld [vmem:[#allocation7 + $0x278] sm:$0xff]
    %v150 = vld [vmem:[#allocation7 + $0x280] sm:$0xff]
    %v151 = vld [vmem:[#allocation7 + $0x288] sm:$0xff]
    %v152 = vld [vmem:[#allocation7 + $0x290] sm:$0xff]
    %v153 = vld [vmem:[#allocation7 + $0x298] sm:$0xff]
    %v154 = vld [vmem:[#allocation7 + $0x2a0] sm:$0xff]
    %v155 = vld [vmem:[#allocation7 + $0x2a8] sm:$0xff]
    %v156 = vld [vmem:[#allocation7 + $0x2b0] sm:$0xff]
    %v157 = vld [vmem:[#allocation7 + $0x2b8] sm:$0xff]
    %v158 = vld [vmem:[#allocation7 + $0x2c0] sm:$0xff]
    %v159 = vld [vmem:[#allocation7 + $0x2c8] sm:$0xff]
    %v160 = vld [vmem:[#allocation7 + $0x2d0] sm:$0xff]
    %v161 = vld [vmem:[#allocation7 + $0x2d8] sm:$0xff]
    %v162 = vld [vmem:[#allocation7 + $0x2e0] sm:$0xff]
    %v163 = vld [vmem:[#allocation7 + $0x2e8] sm:$0xff]
    %v164 = vld [vmem:[#allocation7 + $0x2f0] sm:$0xff]
    %v165 = vld [vmem:[#allocation7 + $0x2f8] sm:$0xff]
    %v166 = vld [vmem:[#allocation5] sm:$0xff]
    %v167 = vld [vmem:[#allocation5 + $0x8] sm:$0xff]
    %v264 = vunpack.c.l.b16 %v70
    %v265 = vunpack.c.h.b16 %v70
    %v266 = vunpack.c.l.b16 %v71
    %v267 = vunpack.c.h.b16 %v71
    %v268 = vunpack.c.l.b16 %v72
    %v269 = vunpack.c.h.b16 %v72
    %v270 = vunpack.c.l.b16 %v73
    %v271 = vunpack.c.h.b16 %v73
    %v272 = vunpack.c.l.b16 %v74
    %v273 = vunpack.c.h.b16 %v74
    %v274 = vunpack.c.l.b16 %v75
    %v275 = vunpack.c.h.b16 %v75
    %v276 = vunpack.c.l.b16 %v76
    %v277 = vunpack.c.h.b16 %v76
    %v278 = vunpack.c.l.b16 %v77
    %v279 = vunpack.c.h.b16 %v77
    %v280 = vunpack.c.l.b16 %v78
    %v281 = vunpack.c.h.b16 %v78
    %v282 = vunpack.c.l.b16 %v79
    %v283 = vunpack.c.h.b16 %v79
    %v284 = vunpack.c.l.b16 %v80
    %v285 = vunpack.c.h.b16 %v80
    %v286 = vunpack.c.l.b16 %v81
    %v287 = vunpack.c.h.b16 %v81
    %v288 = vunpack.c.l.b16 %v82
    %v289 = vunpack.c.h.b16 %v82
    %v290 = vunpack.c.l.b16 %v83
    %v291 = vunpack.c.h.b16 %v83
    %v292 = vunpack.c.l.b16 %v84
    %v293 = vunpack.c.h.b16 %v84
    %v294 = vunpack.c.l.b16 %v85
    %v295 = vunpack.c.h.b16 %v85
    %v296 = vunpack.c.l.b16 %v86
    %v297 = vunpack.c.h.b16 %v86
    %v298 = vunpack.c.l.b16 %v87
    %v299 = vunpack.c.h.b16 %v87
    %v300 = vunpack.c.l.b16 %v88
    %v301 = vunpack.c.h.b16 %v88
    %v302 = vunpack.c.l.b16 %v89
    %v303 = vunpack.c.h.b16 %v89
    %v304 = vunpack.c.l.b16 %v90
    %v305 = vunpack.c.h.b16 %v90
    %v306 = vunpack.c.l.b16 %v91
    %v307 = vunpack.c.h.b16 %v91
    %v308 = vunpack.c.l.b16 %v92
    %v309 = vunpack.c.h.b16 %v92
    %v310 = vunpack.c.l.b16 %v93
    %v311 = vunpack.c.h.b16 %v93
    %v312 = vunpack.c.l.b16 %v94
    %v313 = vunpack.c.h.b16 %v94
    %v314 = vunpack.c.l.b16 %v95
    %v315 = vunpack.c.h.b16 %v95
    %v316 = vunpack.c.l.b16 %v96
    %v317 = vunpack.c.h.b16 %v96
    %v318 = vunpack.c.l.b16 %v97
    %v319 = vunpack.c.h.b16 %v97
    %v320 = vunpack.c.l.b16 %v98
    %v321 = vunpack.c.h.b16 %v98
    %v322 = vunpack.c.l.b16 %v99
    %v323 = vunpack.c.h.b16 %v99
    %v324 = vunpack.c.l.b16 %v100
    %v325 = vunpack.c.h.b16 %v100
    %v326 = vunpack.c.l.b16 %v101
    %v327 = vunpack.c.h.b16 %v101
    %v328 = vunpack.c.l.b16 %v102
    %v329 = vunpack.c.h.b16 %v102
    %v330 = vunpack.c.l.b16 %v103
    %v331 = vunpack.c.h.b16 %v103
    %v332 = vunpack.c.l.b16 %v104
    %v333 = vunpack.c.h.b16 %v104
    %v334 = vunpack.c.l.b16 %v105
    %v335 = vunpack.c.h.b16 %v105
    %v336 = vunpack.c.l.b16 %v106
    %v337 = vunpack.c.h.b16 %v106
    %v338 = vunpack.c.l.b16 %v107
    %v339 = vunpack.c.h.b16 %v107
    %v340 = vunpack.c.l.b16 %v108
    %v341 = vunpack.c.h.b16 %v108
    %v342 = vunpack.c.l.b16 %v109
    %v343 = vunpack.c.h.b16 %v109
    %v344 = vunpack.c.l.b16 %v110
    %v345 = vunpack.c.h.b16 %v110
    %v346 = vunpack.c.l.b16 %v111
    %v347 = vunpack.c.h.b16 %v111
    %v348 = vunpack.c.l.b16 %v112
    %v349 = vunpack.c.h.b16 %v112
    %v350 = vunpack.c.l.b16 %v113
    %v351 = vunpack.c.h.b16 %v113
    %v352 = vunpack.c.l.b16 %v114
    %v353 = vunpack.c.h.b16 %v114
    %v354 = vunpack.c.l.b16 %v115
    %v355 = vunpack.c.h.b16 %v115
    %v356 = vunpack.c.l.b16 %v116
    %v357 = vunpack.c.h.b16 %v116
    %v358 = vunpack.c.l.b16 %v117
    %v359 = vunpack.c.h.b16 %v117
    %v360 = vunpack.c.l.b16 %v118
    %v361 = vunpack.c.h.b16 %v118
    %v362 = vunpack.c.l.b16 %v119
    %v363 = vunpack.c.h.b16 %v119
    %v364 = vunpack.c.l.b16 %v120
    %v365 = vunpack.c.h.b16 %v120
    %v366 = vunpack.c.l.b16 %v121
    %v367 = vunpack.c.h.b16 %v121
    %v368 = vunpack.c.l.b16 %v122
    %v369 = vunpack.c.h.b16 %v122
    %v370 = vunpack.c.l.b16 %v123
    %v371 = vunpack.c.h.b16 %v123
    %v372 = vunpack.c.l.b16 %v124
    %v373 = vunpack.c.h.b16 %v124
    %v374 = vunpack.c.l.b16 %v125
    %v375 = vunpack.c.h.b16 %v125
    %v376 = vunpack.c.l.b16 %v126
    %v377 = vunpack.c.h.b16 %v126
    %v378 = vunpack.c.l.b16 %v127
    %v379 = vunpack.c.h.b16 %v127
    %v380 = vunpack.c.l.b16 %v128
    %v381 = vunpack.c.h.b16 %v128
    %v382 = vunpack.c.l.b16 %v129
    %v383 = vunpack.c.h.b16 %v129
    %v384 = vunpack.c.l.b16 %v130
    %v385 = vunpack.c.h.b16 %v130
    %v386 = vunpack.c.l.b16 %v131
    %v387 = vunpack.c.h.b16 %v131
    %v388 = vunpack.c.l.b16 %v132
    %v389 = vunpack.c.h.b16 %v132
    %v390 = vunpack.c.l.b16 %v133
    %v391 = vunpack.c.h.b16 %v133
    %v392 = vunpack.c.l.b16 %v134
    %v393 = vunpack.c.h.b16 %v134
    %v394 = vunpack.c.l.b16 %v135
    %v395 = vunpack.c.h.b16 %v135
    %v396 = vunpack.c.l.b16 %v136
    %v397 = vunpack.c.h.b16 %v136
    %v398 = vunpack.c.l.b16 %v137
    %v399 = vunpack.c.h.b16 %v137
    %v400 = vunpack.c.l.b16 %v138
    %v401 = vunpack.c.h.b16 %v138
    %v402 = vunpack.c.l.b16 %v139
    %v403 = vunpack.c.h.b16 %v139
    %v404 = vunpack.c.l.b16 %v140
    %v405 = vunpack.c.h.b16 %v140
    %v406 = vunpack.c.l.b16 %v141
    %v407 = vunpack.c.h.b16 %v141
    %v408 = vunpack.c.l.b16 %v142
    %v409 = vunpack.c.h.b16 %v142
    %v410 = vunpack.c.l.b16 %v143
    %v411 = vunpack.c.h.b16 %v143
    %v412 = vunpack.c.l.b16 %v144
    %v413 = vunpack.c.h.b16 %v144
    %v414 = vunpack.c.l.b16 %v145
    %v415 = vunpack.c.h.b16 %v145
    %v416 = vunpack.c.l.b16 %v146
    %v417 = vunpack.c.h.b16 %v146
    %v418 = vunpack.c.l.b16 %v147
    %v419 = vunpack.c.h.b16 %v147
    %v420 = vunpack.c.l.b16 %v148
    %v421 = vunpack.c.h.b16 %v148
    %v422 = vunpack.c.l.b16 %v149
    %v423 = vunpack.c.h.b16 %v149
    %v424 = vunpack.c.l.b16 %v150
    %v425 = vunpack.c.h.b16 %v150
    %v426 = vunpack.c.l.b16 %v151
    %v427 = vunpack.c.h.b16 %v151
    %v428 = vunpack.c.l.b16 %v152
    %v429 = vunpack.c.h.b16 %v152
    %v430 = vunpack.c.l.b16 %v153
    %v431 = vunpack.c.h.b16 %v153
    %v432 = vunpack.c.l.b16 %v154
    %v433 = vunpack.c.h.b16 %v154
    %v434 = vunpack.c.l.b16 %v155
    %v435 = vunpack.c.h.b16 %v155
    %v436 = vunpack.c.l.b16 %v156
    %v437 = vunpack.c.h.b16 %v156
    %v438 = vunpack.c.l.b16 %v157
    %v439 = vunpack.c.h.b16 %v157
    %v440 = vunpack.c.l.b16 %v158
    %v441 = vunpack.c.h.b16 %v158
    %v442 = vunpack.c.l.b16 %v159
    %v443 = vunpack.c.h.b16 %v159
    %v444 = vunpack.c.l.b16 %v160
    %v445 = vunpack.c.h.b16 %v160
    %v446 = vunpack.c.l.b16 %v161
    %v447 = vunpack.c.h.b16 %v161
    %v448 = vunpack.c.l.b16 %v162
    %v449 = vunpack.c.h.b16 %v162
    %v450 = vunpack.c.l.b16 %v163
    %v451 = vunpack.c.h.b16 %v163
    %v452 = vunpack.c.l.b16 %v164
    %v453 = vunpack.c.h.b16 %v164
    %v454 = vunpack.c.l.b16 %v165
    %v455 = vunpack.c.h.b16 %v165
    %v456 = vpack.c.b16 %v266, %v264
    %v457 = vpack.c.b16 %v267, %v265
    %v458 = vpack.c.b16 %v270, %v268
    %v459 = vpack.c.b16 %v271, %v269
    %v460 = vpack.c.b16 %v274, %v272
    %v461 = vpack.c.b16 %v275, %v273
    %v462 = vpack.c.b16 %v278, %v276
    %v463 = vpack.c.b16 %v279, %v277
    %v464 = vpack.c.b16 %v282, %v280
    %v465 = vpack.c.b16 %v283, %v281
    %v466 = vpack.c.b16 %v286, %v284
    %v467 = vpack.c.b16 %v287, %v285
    %v468 = vpack.c.b16 %v290, %v288
    %v469 = vpack.c.b16 %v291, %v289
    %v470 = vpack.c.b16 %v294, %v292
    %v471 = vpack.c.b16 %v295, %v293
    %v472 = vpack.c.b16 %v298, %v296
    %v473 = vpack.c.b16 %v299, %v297
    %v474 = vpack.c.b16 %v302, %v300
    %v475 = vpack.c.b16 %v303, %v301
    %v476 = vpack.c.b16 %v306, %v304
    %v477 = vpack.c.b16 %v307, %v305
    %v478 = vpack.c.b16 %v310, %v308
    %v479 = vpack.c.b16 %v311, %v309
    %v480 = vpack.c.b16 %v314, %v312
    %v481 = vpack.c.b16 %v315, %v313
    %v482 = vpack.c.b16 %v318, %v316
    %v483 = vpack.c.b16 %v319, %v317
    %v484 = vpack.c.b16 %v322, %v320
    %v485 = vpack.c.b16 %v323, %v321
    %v486 = vpack.c.b16 %v326, %v324
    %v487 = vpack.c.b16 %v327, %v325
    %v488 = vpack.c.b16 %v330, %v328
    %v489 = vpack.c.b16 %v331, %v329
    %v490 = vpack.c.b16 %v334, %v332
    %v491 = vpack.c.b16 %v335, %v333
    %v492 = vpack.c.b16 %v338, %v336
    %v493 = vpack.c.b16 %v339, %v337
    %v494 = vpack.c.b16 %v342, %v340
    %v495 = vpack.c.b16 %v343, %v341
    %v496 = vpack.c.b16 %v346, %v344
    %v497 = vpack.c.b16 %v347, %v345
    %v498 = vpack.c.b16 %v350, %v348
    %v499 = vpack.c.b16 %v351, %v349
    %v500 = vpack.c.b16 %v354, %v352
    %v501 = vpack.c.b16 %v355, %v353
    %v502 = vpack.c.b16 %v358, %v356
    %v503 = vpack.c.b16 %v359, %v357
    %v504 = vpack.c.b16 %v362, %v360
    %v505 = vpack.c.b16 %v363, %v361
    %v506 = vpack.c.b16 %v366, %v364
    %v507 = vpack.c.b16 %v367, %v365
    %v508 = vpack.c.b16 %v370, %v368
    %v509 = vpack.c.b16 %v371, %v369
    %v510 = vpack.c.b16 %v374, %v372
    %v511 = vpack.c.b16 %v375, %v373
    %v512 = vpack.c.b16 %v378, %v376
    %v513 = vpack.c.b16 %v379, %v377
    %v514 = vpack.c.b16 %v382, %v380
    %v515 = vpack.c.b16 %v383, %v381
    %v516 = vpack.c.b16 %v386, %v384
    %v517 = vpack.c.b16 %v387, %v385
    %v518 = vpack.c.b16 %v390, %v388
    %v519 = vpack.c.b16 %v391, %v389
    %v520 = vpack.c.b16 %v394, %v392
    %v521 = vpack.c.b16 %v395, %v393
    %v522 = vpack.c.b16 %v398, %v396
    %v523 = vpack.c.b16 %v399, %v397
    %v524 = vpack.c.b16 %v402, %v400
    %v525 = vpack.c.b16 %v403, %v401
    %v526 = vpack.c.b16 %v406, %v404
    %v527 = vpack.c.b16 %v407, %v405
    %v528 = vpack.c.b16 %v410, %v408
    %v529 = vpack.c.b16 %v411, %v409
    %v530 = vpack.c.b16 %v414, %v412
    %v531 = vpack.c.b16 %v415, %v413
    %v532 = vpack.c.b16 %v418, %v416
    %v533 = vpack.c.b16 %v419, %v417
    %v534 = vpack.c.b16 %v422, %v420
    %v535 = vpack.c.b16 %v423, %v421
    %v536 = vpack.c.b16 %v426, %v424
    %v537 = vpack.c.b16 %v427, %v425
    %v538 = vpack.c.b16 %v430, %v428
    %v539 = vpack.c.b16 %v431, %v429
    %v540 = vpack.c.b16 %v434, %v432
    %v541 = vpack.c.b16 %v435, %v433
    %v542 = vpack.c.b16 %v438, %v436
    %v543 = vpack.c.b16 %v439, %v437
    %v544 = vpack.c.b16 %v442, %v440
    %v545 = vpack.c.b16 %v443, %v441
    %v546 = vpack.c.b16 %v446, %v444
    %v547 = vpack.c.b16 %v447, %v445
    %v548 = vpack.c.b16 %v450, %v448
    %v549 = vpack.c.b16 %v451, %v449
    %v550 = vpack.c.b16 %v454, %v452
    %v551 = vpack.c.b16 %v455, %v453
    %648 = vmatprep.subr.bf16.mxu0 %v471
    %649 = vmatpush1.bf16.msra.mxu0 %v470
    %650 = vmatprep.subr.bf16.mxu0 %v469
    %651 = vmatpush1.bf16.msra.mxu0 %v468
    %652 = vmatprep.subr.bf16.mxu0 %v467
    %653 = vmatpush1.bf16.msra.mxu0 %v466
    %654 = vmatprep.subr.bf16.mxu0 %v465
    %655 = vmatpush1.bf16.msra.mxu0 %v464
    %656 = vmatprep.subr.bf16.mxu0 %v463
    %657 = vmatpush1.bf16.msra.mxu0 %v462
    %658 = vmatprep.subr.bf16.mxu0 %v461
    %659 = vmatpush1.bf16.msra.mxu0 %v460
    %660 = vmatprep.subr.bf16.mxu0 %v459
    %661 = vmatpush1.bf16.msra.mxu0 %v458
    %662 = vmatprep.subr.bf16.mxu0 %v457
    %663 = vmatpush1.bf16.msra.mxu0 %v456
    %664 = vmatprep.subr.bf16.mxu0 %v487
    %665 = vmatpush2.bf16.msra.mxu0 %v486
    %666 = vmatprep.subr.bf16.mxu0 %v485
    %667 = vmatpush2.bf16.msra.mxu0 %v484
    %668 = vmatprep.subr.bf16.mxu0 %v483
    %669 = vmatpush2.bf16.msra.mxu0 %v482
    %670 = vmatprep.subr.bf16.mxu0 %v481
    %671 = vmatpush2.bf16.msra.mxu0 %v480
    %672 = vmatprep.subr.bf16.mxu0 %v479
    %673 = vmatpush2.bf16.msra.mxu0 %v478
    %674 = vmatprep.subr.bf16.mxu0 %v477
    %675 = vmatpush2.bf16.msra.mxu0 %v476
    %676 = vmatprep.subr.bf16.mxu0 %v475
    %677 = vmatpush2.bf16.msra.mxu0 %v474
    %678 = vmatprep.subr.bf16.mxu0 %v473
    %679 = vmatpush2.bf16.msra.mxu0 %v472
    %680 = vmatprep.mubr.bf16.mxu0 %v65
    %681 = vmatmul.mubr.bf16.gmra.mxu0 %v64
    %v682 = vpop.f32.mrf.mxu0
    %v683 = vadd.f32 %v166, %v682
    %v684 = vpop.f32.mrf.mxu0
    %v685 = vadd.f32 %v167, %v684
    %v686 = vpop.f32.mrf.mxu0
    %v687 = vpop.f32.mrf.mxu0
    %688 = vdwg.mxu0
    %689 = vmatprep.subr.bf16.mxu0 %v503
    %690 = vmatpush1.bf16.msra.mxu0 %v502
    %691 = vmatprep.subr.bf16.mxu0 %v501
    %692 = vmatpush1.bf16.msra.mxu0 %v500
    %693 = vmatprep.subr.bf16.mxu0 %v499
    %694 = vmatpush1.bf16.msra.mxu0 %v498
    %695 = vmatprep.subr.bf16.mxu0 %v497
    %696 = vmatpush1.bf16.msra.mxu0 %v496
    %697 = vmatprep.subr.bf16.mxu0 %v495
    %698 = vmatpush1.bf16.msra.mxu0 %v494
    %699 = vmatprep.subr.bf16.mxu0 %v493
    %700 = vmatpush1.bf16.msra.mxu0 %v492
    %701 = vmatprep.subr.bf16.mxu0 %v491
    %702 = vmatpush1.bf16.msra.mxu0 %v490
    %703 = vmatprep.subr.bf16.mxu0 %v489
    %704 = vmatpush1.bf16.msra.mxu0 %v488
    %705 = vmatprep.subr.bf16.mxu0 %v519
    %706 = vmatpush2.bf16.msra.mxu0 %v518
    %707 = vmatprep.subr.bf16.mxu0 %v517
    %708 = vmatpush2.bf16.msra.mxu0 %v516
    %709 = vmatprep.subr.bf16.mxu0 %v515
    %710 = vmatpush2.bf16.msra.mxu0 %v514
    %711 = vmatprep.subr.bf16.mxu0 %v513
    %712 = vmatpush2.bf16.msra.mxu0 %v512
    %713 = vmatprep.subr.bf16.mxu0 %v511
    %714 = vmatpush2.bf16.msra.mxu0 %v510
    %715 = vmatprep.subr.bf16.mxu0 %v509
    %716 = vmatpush2.bf16.msra.mxu0 %v508
    %717 = vmatprep.subr.bf16.mxu0 %v507
    %718 = vmatpush2.bf16.msra.mxu0 %v506
    %719 = vmatprep.subr.bf16.mxu0 %v505
    %720 = vmatpush2.bf16.msra.mxu0 %v504
    %721 = vmatprep.mubr.bf16.mxu0 %v67
    %722 = vmatmul.mubr.bf16.gmra.mxu0 %v66
    %v723 = vpop.f32.mrf.mxu0
    %v724 = vadd.f32 %v683, %v723
    %v725 = vpop.f32.mrf.mxu0
    %v726 = vadd.f32 %v685, %v725
    %v727 = vpop.f32.mrf.mxu0
    %v728 = vpop.f32.mrf.mxu0
    %729 = vdwg.mxu0
    %730 = vmatprep.subr.bf16.mxu0 %v535
    %731 = vmatpush1.bf16.msra.mxu0 %v534
    %732 = vmatprep.subr.bf16.mxu0 %v533
    %733 = vmatpush1.bf16.msra.mxu0 %v532
    %734 = vmatprep.subr.bf16.mxu0 %v531
    %735 = vmatpush1.bf16.msra.mxu0 %v530
    %736 = vmatprep.subr.bf16.mxu0 %v529
    %737 = vmatpush1.bf16.msra.mxu0 %v528
    %738 = vmatprep.subr.bf16.mxu0 %v527
    %739 = vmatpush1.bf16.msra.mxu0 %v526
    %740 = vmatprep.subr.bf16.mxu0 %v525
    %741 = vmatpush1.bf16.msra.mxu0 %v524
    %742 = vmatprep.subr.bf16.mxu0 %v523
    %743 = vmatpush1.bf16.msra.mxu0 %v522
    %744 = vmatprep.subr.bf16.mxu0 %v521
    %745 = vmatpush1.bf16.msra.mxu0 %v520
    %746 = vmatprep.subr.bf16.mxu0 %v551
    %747 = vmatpush2.bf16.msra.mxu0 %v550
    %748 = vmatprep.subr.bf16.mxu0 %v549
    %749 = vmatpush2.bf16.msra.mxu0 %v548
    %750 = vmatprep.subr.bf16.mxu0 %v547
    %751 = vmatpush2.bf16.msra.mxu0 %v546
    %752 = vmatprep.subr.bf16.mxu0 %v545
    %753 = vmatpush2.bf16.msra.mxu0 %v544
    %754 = vmatprep.subr.bf16.mxu0 %v543
    %755 = vmatpush2.bf16.msra.mxu0 %v542
    %756 = vmatprep.subr.bf16.mxu0 %v541
    %757 = vmatpush2.bf16.msra.mxu0 %v540
    %758 = vmatprep.subr.bf16.mxu0 %v539
    %759 = vmatpush2.bf16.msra.mxu0 %v538
    %760 = vmatprep.subr.bf16.mxu0 %v537
    %761 = vmatpush2.bf16.msra.mxu0 %v536
    %762 = vmatprep.mubr.bf16.mxu0 %v69
    %763 = vmatmul.mubr.bf16.gmra.mxu0 %v68
    %v764 = vpop.f32.mrf.mxu0
    %v765 = vadd.f32 %v724, %v764
    %v766 = vpop.f32.mrf.mxu0
    %v767 = vadd.f32 %v726, %v766
    %v768 = vpop.f32.mrf.mxu0
    %v769 = vpop.f32.mrf.mxu0
    %770 = vdwg.mxu0
    %v771 = vmax.f32 %v765, 0.0
    %v772 = vmax.f32 %v767, 0.0
    %v773 = vld [vmem:[%s3] sm:$0x3]
    %v775 = vlaneseq
    %v776 = vshrl.u32 %v775, 7
    %v777 = vsub.s32 0, %v776
    %v778 = vrot.slane %v773, %v777
    %v779 = vlaneseq
    %v780 = vshrl.u32 %v779, 7
    %v781 = vsub.s32 1, %v780
    %v782 = vrot.slane %v773, %v781
    %v785 = vmul.f32 %v771, %v778
    %v786 = vmul.f32 %v772, %v782
    %v787 = vadd.f32 %v785, %v786
    %788 = vadd.xlane.f32.xlu0 %v787
    %v789 = vpop.xlane.xlu0 %788
    %s790 = sld [smem:[#allocation2]]
    %v791 = vstv %s790
    %v792 = vadd.f32 %v789, %v791
    %vm793 = vcmask 7168
    %794 = vst.msk [vmem:[%s5] sm:$0xff] %vm793, %v792
    // Predicated region
    $region34: #{tpu_custom_call.1} parent=1 // pred_check
      _
    $region35: #{tpu_custom_call.1} parent=1 // pred_check_branch
      %796 = sbr.rel (0) target = $region37
    $region36: #{tpu_custom_call.1} parent=1 // pred_region
      _
    $region37: #{tpu_custom_call.1} parent=1 // pred_fallthru
      _
    // Predicated region
    $region38: #{tpu_custom_call.1} parent=1 // pred_check
      _
    $region39: #{tpu_custom_call.1} parent=1 // pred_check_branch
      %798 = sbr.rel (0) target = $region41
    $region40: #{tpu_custom_call.1} parent=1 // pred_region
      _
    $region41: #{tpu_custom_call.1} parent=1 // pred_fallthru
      _
    %799 = vsyncpa [#allocation4], 1
    %800 = vsyncpa [#allocation6], 1

</llo_original>
